<compile_context>
chip_gen: v7x
topology: tpu7x:2x2x1
jax: 0.10.0
libtpu: 0.0.40
codegen_flags: <defaults>
</compile_context>

<pallas_src>
import functools

import jax
import jax.numpy as jnp
from jax.experimental import pallas as pl
from jax.experimental.pallas import tpu as pltpu


LN_EPS = 1e-5


# ----------------------------- shared block math -----------------------------
def _one_block(x, cond_b, wg, wog, w1, b1, w2, b2):
    """One dif_block. x: f32 (tb, H); cond_b: bf16 (tb, H); weights bf16, biases f32."""
    # AdaptiveLayerNorm (eps=1e-5, elementwise_affine=False) in f32.
    mean = jnp.mean(x, axis=-1, keepdims=True)
    centered = x - mean
    var = jnp.mean(centered * centered, axis=-1, keepdims=True)
    normed = centered * jax.lax.rsqrt(var + LN_EPS)

    # Two separate gate projections (avoids mid-vreg slicing of a fused (H,2H)
    # result, which is costly when H is not a multiple of 128).
    gamma = jnp.dot(cond_b, wg, preferred_element_type=jnp.float32)
    og = jnp.dot(cond_b, wog, preferred_element_type=jnp.float32)

    h = (normed * (gamma + 1.0)).astype(jnp.bfloat16)

    # Linear -> SiLU -> Dropout(p=0, identity) -> Linear (bf16 MXU, f32 accumulate).
    h1 = jnp.dot(h, w1, preferred_element_type=jnp.float32) + b1
    h1 = h1 * jax.nn.sigmoid(h1)                      # SiLU (EUP)
    h2 = jnp.dot(h1.astype(jnp.bfloat16), w2, preferred_element_type=jnp.float32) + b2

    # output gate + residual
    return h2 * (og + 1.0) + x


# ------------------- kernel A: VMEM-resident stacked weights -----------------
def _resident_kernel(x_ref, cond_ref, wg_ref, wog_ref, w1_ref, b1_ref, w2_ref,
                     b2_ref, o_ref, *, n_blocks, unroll):
    """grid=(n_batch_tiles,). All stacked weights stay resident in VMEM; the
    block loop runs inside the kernel, activation stays in registers/VMEM temps."""
    x = x_ref[...].astype(jnp.float32)
    cond_b = cond_ref[...].astype(jnp.bfloat16)       # cast cond once per tile

    def body(blk, acc):
        return _one_block(acc, cond_b, wg_ref[blk], wog_ref[blk], w1_ref[blk],
                          b1_ref[blk], w2_ref[blk], b2_ref[blk])

    if unroll:
        for blk in range(n_blocks):
            x = body(blk, x)
    else:
        x = jax.lax.fori_loop(0, n_blocks, body, x)

    o_ref[...] = x.astype(o_ref.dtype)


# ------------------- kernel B: streamed per-block weights --------------------
def _streamed_kernel(x_ref, cond_ref, wg_ref, wog_ref, w1_ref, b1_ref, w2_ref,
                     b2_ref, o_ref, act_ref, cond_b_ref):
    """grid=(n_batch_tiles, n_blocks). Activation carried in f32 VMEM scratch,
    per-block weights streamed (double-buffered) along the 'arbitrary' axis."""
    blk = pl.program_id(1)

    @pl.when(blk == 0)
    def _():
        act_ref[...] = x_ref[...].astype(jnp.float32)
        cond_b_ref[...] = cond_ref[...].astype(jnp.bfloat16)   # cache bf16 cond

    out = _one_block(act_ref[...], cond_b_ref[...], wg_ref[...], wog_ref[...],
                     w1_ref[...], b1_ref[...], w2_ref[...], b2_ref[...])
    act_ref[...] = out

    @pl.when(blk == pl.num_programs(1) - 1)
    def _():
        o_ref[...] = out.astype(o_ref.dtype)


# -------------------------------- helpers -------------------------------------
def _round_up(x, m):
    return ((x + m - 1) // m) * m


def _chip_config():
    """(vmem_limit_bytes, n_tensorcores, tb_max) — generation aware, safe fallback."""
    vmem_limit = 100 * 2**20      # v5e / v6e: 128 MiB physical VMEM
    n_cores = 1
    tb_max = 1024
    try:
        kind = jax.devices()[0].device_kind.lower()
        if "v7" in kind:
            vmem_limit = 48 * 2**20   # 64 MiB/TC physical; leave compiler headroom
            n_cores = 2
            tb_max = 512
    except Exception:
        pass
    return vmem_limit, n_cores, tb_max


def stack_params(params):
    """Stack per-block weights along a leading block axis; matrices in bf16."""
    return {
        "wg":  jnp.stack([p["wg"] for p in params]).astype(jnp.bfloat16),   # (n, H, H)
        "wog": jnp.stack([p["wog"] for p in params]).astype(jnp.bfloat16),  # (n, H, H)
        "w1":  jnp.stack([p["w1"] for p in params]).astype(jnp.bfloat16),   # (n, H, 4H)
        "b1":  jnp.stack([p["b1"] for p in params]).astype(jnp.float32),    # (n, 1, 4H)
        "w2":  jnp.stack([p["w2"] for p in params]).astype(jnp.bfloat16),   # (n, 4H, H)
        "b2":  jnp.stack([p["b2"] for p in params]).astype(jnp.float32),    # (n, 1, H)
    }


# -------------------------------- wrapper -------------------------------------
def mlp_forward_pallas(noised, cond, stacked):
    B, H = noised.shape
    nblk, _, H4 = stacked["w1"].shape

    vmem_limit, n_cores, tb_max = _chip_config()

    # ---- weight footprint (bf16 matrices + f32 biases) ----------------------
    per_block_w_bytes = 20 * H * H + 4 * (H4 + H)
    total_w_bytes = nblk * per_block_w_bytes
    # Resident if even a pessimistic 2x (double-buffered) copy fits comfortably.
    resident = 2 * total_w_bytes <= vmem_limit // 2

    # ---- batch tile: as large as VMEM allows; >=2 tiles on dual-TC chips ----
    per_row_bytes = 4 * (10 * H + 4 * H4)     # f32 tiles + intermediates (approx)
    avail = vmem_limit - (2 * total_w_bytes if resident else 3 * per_block_w_bytes)
    tb_vmem = max(8, int(0.7 * max(avail, 0)) // max(per_row_bytes, 1))
    tb_cap = min(tb_max, max(8, (tb_vmem // 8) * 8))

    if n_cores >= 2 and B >= 16:
        tb = min(tb_cap, _round_up(-(-B // 2), 8))   # guarantee >= 2 batch tiles
    else:
        tb = min(tb_cap, B)

    if tb >= B:
        tb_eff, pad = B, 0                 # single tile == full batch, no padding
    else:
        tb_eff = max(8, (tb // 8) * 8)
        pad = (-B) % tb_eff

    x, c = noised, cond
    if pad:
        # Padded rows are all-zero: LayerNorm gives normed = 0 (no NaN) and the
        # rows are sliced off below, so padding is semantically inert.
        x = jnp.pad(x, ((0, pad), (0, 0)))
        c = jnp.pad(c, ((0, pad), (0, 0)))
    Bp = B + pad
    n_tiles = Bp // tb_eff

    flops = int(20 * Bp * nblk * H * H)                 # 5 matmuls per block
    transcendentals = int(Bp * nblk * (4 * H + 1))      # sigmoid + rsqrt

    if resident:
        grid = (n_tiles,)

        def tile_spec():
            return pl.BlockSpec((tb_eff, H), lambda i: (i, 0))

        def w_spec(shape):
            # Full stacked block, constant index -> DMA'd once, reused by all tiles.
            return pl.BlockSpec((nblk,) + shape, lambda i: (0, 0, 0))

        kernel = functools.partial(_resident_kernel, n_blocks=nblk,
                                   unroll=(nblk <= 16))
        scratch = []
        dim_sems = ("parallel",)
        bytes_accessed = int(3 * Bp * H * 4 + total_w_bytes)
    else:
        grid = (n_tiles, nblk)

        def tile_spec():
            return pl.BlockSpec((tb_eff, H), lambda i, b: (i, 0))

        def w_spec(shape):
            return pl.BlockSpec((pl.Squeezed(),) + shape, lambda i, b: (b, 0, 0))

        kernel = _streamed_kernel
        scratch = [pltpu.VMEM((tb_eff, H), jnp.float32),    # activation carry
                   pltpu.VMEM((tb_eff, H), jnp.bfloat16)]   # cached bf16 cond
        dim_sems = ("parallel", "arbitrary")
        # Weights are re-streamed once per batch tile in this path.
        bytes_accessed = int(3 * Bp * H * 4 + n_tiles * total_w_bytes)

    out = pl.pallas_call(
        kernel,
        out_shape=jax.ShapeDtypeStruct((Bp, H), noised.dtype),
        grid_spec=pltpu.PrefetchScalarGridSpec(
            num_scalar_prefetch=0,
            grid=grid,
            in_specs=[
                tile_spec(),               # noised tile
                tile_spec(),               # cond tile
                w_spec((H, H)),            # to_gamma^T
                w_spec((H, H)),            # block_out_gamma^T
                w_spec((H, H4)),           # W1^T
                w_spec((1, H4)),           # b1
                w_spec((H4, H)),           # W2^T
                w_spec((1, H)),            # b2
            ],
            out_specs=tile_spec(),
            scratch_shapes=scratch,
        ),
        compiler_params=pltpu.CompilerParams(
            dimension_semantics=dim_sems,
            vmem_limit_bytes=int(vmem_limit)),
        cost_estimate=pl.CostEstimate(
            flops=flops, transcendentals=transcendentals,
            bytes_accessed=bytes_accessed),
    )(x, c, stacked["wg"], stacked["wog"], stacked["w1"], stacked["b1"],
      stacked["w2"], stacked["b2"])

    return out[:B] if pad else out


# ------------------------- plain-JAX reference ------------------------------
def mlp_forward_ref(noised, cond, params, *, bf16_matmul=True):
    """Reference with the same precision policy as the kernel when bf16_matmul."""
    mm = jnp.bfloat16 if bf16_matmul else jnp.float32
    x = noised.astype(jnp.float32)
    c = cond.astype(jnp.float32)
    for p in params:
        residual = x
        mean = jnp.mean(x, axis=-1, keepdims=True)
        var = jnp.mean((x - mean) ** 2, axis=-1, keepdims=True)
        normed = (x - mean) * jax.lax.rsqrt(var + LN_EPS)
        gamma = jnp.dot(c.astype(mm), p["wg"].astype(mm),
                        preferred_element_type=jnp.float32)
        og = jnp.dot(c.astype(mm), p["wog"].astype(mm),
                     preferred_element_type=jnp.float32)
        h = normed * (gamma + 1.0)
        h1 = jnp.dot(h.astype(mm), p["w1"].astype(mm),
                     preferred_element_type=jnp.float32) + p["b1"]
        h1 = h1 * jax.nn.sigmoid(h1)
        h2 = jnp.dot(h1.astype(mm), p["w2"].astype(mm),
                     preferred_element_type=jnp.float32) + p["b2"]
        x = h2 * (og + 1.0) + residual
    return x.astype(noised.dtype)


# ------------------------- deterministic init -------------------------------
def init_params(key, hidden_size, dif_blocks):
    """PyTorch defaults: Linear weight/bias ~ U(-1/sqrt(fan_in), +); to_gamma and
    block_out_gamma weights are zero-initialized (as in __init__)."""
    H = hidden_size
    H4 = 4 * H
    params = []
    for _ in range(dif_blocks):
        key, k1, k2, k3, k4 = jax.random.split(key, 5)
        bound1 = 1.0 / jnp.sqrt(H)
        bound2 = 1.0 / jnp.sqrt(H4)
        params.append({
            # stored transposed: (in_features, out_features)
            "wg":  jnp.zeros((H, H), jnp.float32),             # nn.init.zeros_
            "w1":  jax.random.uniform(k1, (H, H4), jnp.float32, -bound1, bound1),
            "b1":  jax.random.uniform(k2, (1, H4), jnp.float32, -bound1, bound1),
            "w2":  jax.random.uniform(k3, (H4, H), jnp.float32, -bound2, bound2),
            "b2":  jax.random.uniform(k4, (1, H), jnp.float32, -bound2, bound2),
            "wog": jnp.zeros((H, H), jnp.float32),             # nn.init.zeros_
        })
    return params


if __name__ == "__main__":
    # args: hidden_size=32, dropout=0.0, dif_blocks=2
    hidden_size = 32
    dif_blocks = 2
    batch = 16

    key = jax.random.PRNGKey(0)
    key, kn, kc = jax.random.split(key, 3)
    noised = jax.random.normal(kn, (batch, hidden_size), jnp.float32)
    cond = jax.random.normal(kc, (batch, hidden_size), jnp.float32)

    params = init_params(key, hidden_size, dif_blocks)
    stacked = stack_params(params)

    out = mlp_forward_pallas(noised, cond, stacked)
    out = jax.block_until_ready(out)

    ref_bf16 = mlp_forward_ref(noised, cond, params, bf16_matmul=True)
    ref_f32 = mlp_forward_ref(noised, cond, params, bf16_matmul=False)

    assert out.shape == (batch, hidden_size)
    assert jnp.allclose(out, ref_bf16, atol=5e-3, rtol=5e-3), \
        "mismatch vs matched-precision reference"
    assert jnp.allclose(out, ref_f32, atol=5e-2, rtol=5e-2), \
        "mismatch vs f32 reference"

    print("KERNEL_OK")
</pallas_src>

<mosaic_0001>
module attributes {stable_mosaic.version = 11 : i64} {
  func.func @_resident_kernel(%arg0: i32, %arg1: memref<16x32xf32, #tpu.memory_space<vmem>>, %arg2: memref<16x32xf32, #tpu.memory_space<vmem>>, %arg3: memref<2x32x32xbf16, #tpu.memory_space<vmem>>, %arg4: memref<2x32x32xbf16, #tpu.memory_space<vmem>>, %arg5: memref<2x32x128xbf16, #tpu.memory_space<vmem>>, %arg6: memref<2x1x128xf32, #tpu.memory_space<vmem>>, %arg7: memref<2x128x32xbf16, #tpu.memory_space<vmem>>, %arg8: memref<2x1x32xf32, #tpu.memory_space<vmem>>, %arg9: memref<16x32xf32, #tpu.memory_space<vmem>>) attributes {dimension_semantics = [#tpu.dimension_semantics<parallel>], iteration_bounds = array<i64: 1>, scalar_prefetch = 0 : i64, scratch_operands = 0 : i64, tpu.core_type = #tpu.core_type<tc>, window_params = [{transform_indices = @transform_0, window_bounds = array<i64: 16, 32>}, {transform_indices = @transform_1, window_bounds = array<i64: 16, 32>}, {pipeline_mode = #tpu.pipeline_mode<synchronous>, transform_indices = @transform_2, window_bounds = array<i64: 2, 32, 32>}, {pipeline_mode = #tpu.pipeline_mode<synchronous>, transform_indices = @transform_3, window_bounds = array<i64: 2, 32, 32>}, {pipeline_mode = #tpu.pipeline_mode<synchronous>, transform_indices = @transform_4, window_bounds = array<i64: 2, 32, 128>}, {pipeline_mode = #tpu.pipeline_mode<synchronous>, transform_indices = @transform_5, window_bounds = array<i64: 2, 1, 128>}, {pipeline_mode = #tpu.pipeline_mode<synchronous>, transform_indices = @transform_6, window_bounds = array<i64: 2, 128, 32>}, {pipeline_mode = #tpu.pipeline_mode<synchronous>, transform_indices = @transform_7, window_bounds = array<i64: 2, 1, 32>}, {transform_indices = @transform_8, window_bounds = array<i64: 16, 32>}]} {
    %c0 = arith.constant 0 : index
    %c0_0 = arith.constant 0 : index
    %0 = vector.load %arg1[%c0, %c0_0] : memref<16x32xf32, #tpu.memory_space<vmem>>, vector<16x32xf32>
    %c0_1 = arith.constant 0 : index
    %c0_2 = arith.constant 0 : index
    %1 = vector.load %arg2[%c0_1, %c0_2] : memref<16x32xf32, #tpu.memory_space<vmem>>, vector<16x32xf32>
    %2 = arith.truncf %1 : vector<16x32xf32> to vector<16x32xbf16>
    %c0_3 = arith.constant 0 : index
    %c0_4 = arith.constant 0 : index
    %c0_5 = arith.constant 0 : index
    %3 = vector.load %arg3[%c0_3, %c0_4, %c0_5] : memref<2x32x32xbf16, #tpu.memory_space<vmem>>, vector<1x32x32xbf16>
    %4 = vector.shape_cast %3 : vector<1x32x32xbf16> to vector<32x32xbf16>
    %c0_6 = arith.constant 0 : index
    %c0_7 = arith.constant 0 : index
    %c0_8 = arith.constant 0 : index
    %5 = vector.load %arg4[%c0_6, %c0_7, %c0_8] : memref<2x32x32xbf16, #tpu.memory_space<vmem>>, vector<1x32x32xbf16>
    %6 = vector.shape_cast %5 : vector<1x32x32xbf16> to vector<32x32xbf16>
    %c0_9 = arith.constant 0 : index
    %c0_10 = arith.constant 0 : index
    %c0_11 = arith.constant 0 : index
    %7 = vector.load %arg5[%c0_9, %c0_10, %c0_11] : memref<2x32x128xbf16, #tpu.memory_space<vmem>>, vector<1x32x128xbf16>
    %8 = vector.shape_cast %7 : vector<1x32x128xbf16> to vector<32x128xbf16>
    %c0_12 = arith.constant 0 : index
    %c0_13 = arith.constant 0 : index
    %c0_14 = arith.constant 0 : index
    %9 = vector.load %arg6[%c0_12, %c0_13, %c0_14] : memref<2x1x128xf32, #tpu.memory_space<vmem>>, vector<1x1x128xf32>
    %10 = vector.shape_cast %9 : vector<1x1x128xf32> to vector<1x128xf32>
    %c0_15 = arith.constant 0 : index
    %c0_16 = arith.constant 0 : index
    %c0_17 = arith.constant 0 : index
    %11 = vector.load %arg7[%c0_15, %c0_16, %c0_17] : memref<2x128x32xbf16, #tpu.memory_space<vmem>>, vector<1x128x32xbf16>
    %12 = vector.shape_cast %11 : vector<1x128x32xbf16> to vector<128x32xbf16>
    %c0_18 = arith.constant 0 : index
    %c0_19 = arith.constant 0 : index
    %c0_20 = arith.constant 0 : index
    %13 = vector.load %arg8[%c0_18, %c0_19, %c0_20] : memref<2x1x32xf32, #tpu.memory_space<vmem>>, vector<1x1x32xf32>
    %14 = vector.shape_cast %13 : vector<1x1x32xf32> to vector<1x32xf32>
    %cst = arith.constant dense<0.000000e+00> : vector<16xf32>
    %15 = vector.multi_reduction <add>, %0, %cst [1] : vector<16x32xf32> to vector<16xf32>
    %16 = vector.shape_cast %15 : vector<16xf32> to vector<16x1xf32>
    %cst_21 = arith.constant 3.200000e+01 : f32
    %17 = vector.broadcast %cst_21 : f32 to vector<16x1xf32>
    %18 = arith.divf %16, %17 : vector<16x1xf32>
    %19 = vector.broadcast %18 : vector<16x1xf32> to vector<16x32xf32>
    %20 = arith.subf %0, %19 : vector<16x32xf32>
    %21 = arith.mulf %20, %20 : vector<16x32xf32>
    %cst_22 = arith.constant dense<0.000000e+00> : vector<16xf32>
    %22 = vector.multi_reduction <add>, %21, %cst_22 [1] : vector<16x32xf32> to vector<16xf32>
    %23 = vector.shape_cast %22 : vector<16xf32> to vector<16x1xf32>
    %cst_23 = arith.constant 3.200000e+01 : f32
    %24 = vector.broadcast %cst_23 : f32 to vector<16x1xf32>
    %25 = arith.divf %23, %24 : vector<16x1xf32>
    %cst_24 = arith.constant 9.99999974E-6 : f32
    %26 = vector.broadcast %cst_24 : f32 to vector<16x1xf32>
    %27 = arith.addf %25, %26 : vector<16x1xf32>
    %28 = math.rsqrt %27 : vector<16x1xf32>
    %29 = vector.broadcast %28 : vector<16x1xf32> to vector<16x32xf32>
    %30 = arith.mulf %20, %29 : vector<16x32xf32>
    %cst_25 = arith.constant dense<0.000000e+00> : vector<16x32xf32>
    %31 = tpu.matmul %2, %4, %cst_25 {dimension_numbers = #tpu.dot_dimension_numbers<[1], [0], [0], [1], [0, 0, 1, 1], [], []>} : vector<16x32xbf16>, vector<32x32xbf16>, vector<16x32xf32> -> vector<16x32xf32>
    %cst_26 = arith.constant dense<0.000000e+00> : vector<16x32xf32>
    %32 = tpu.matmul %2, %6, %cst_26 {dimension_numbers = #tpu.dot_dimension_numbers<[1], [0], [0], [1], [0, 0, 1, 1], [], []>} : vector<16x32xbf16>, vector<32x32xbf16>, vector<16x32xf32> -> vector<16x32xf32>
    %cst_27 = arith.constant 1.000000e+00 : f32
    %33 = vector.broadcast %cst_27 : f32 to vector<16x32xf32>
    %34 = arith.addf %31, %33 : vector<16x32xf32>
    %35 = arith.mulf %30, %34 : vector<16x32xf32>
    %36 = arith.truncf %35 : vector<16x32xf32> to vector<16x32xbf16>
    %cst_28 = arith.constant dense<0.000000e+00> : vector<16x128xf32>
    %37 = tpu.matmul %36, %8, %cst_28 {dimension_numbers = #tpu.dot_dimension_numbers<[1], [0], [0], [1], [0, 0, 1, 1], [], []>} : vector<16x32xbf16>, vector<32x128xbf16>, vector<16x128xf32> -> vector<16x128xf32>
    %38 = vector.broadcast %10 : vector<1x128xf32> to vector<16x128xf32>
    %39 = arith.addf %37, %38 : vector<16x128xf32>
    %40 = arith.negf %39 : vector<16x128xf32>
    %41 = math.exp %40 : vector<16x128xf32>
    %cst_29 = arith.constant 1.000000e+00 : f32
    %42 = vector.broadcast %cst_29 : f32 to vector<16x128xf32>
    %43 = arith.addf %42, %41 : vector<16x128xf32>
    %44 = arith.divf %42, %43 : vector<16x128xf32>
    %45 = arith.mulf %39, %44 : vector<16x128xf32>
    %46 = arith.truncf %45 : vector<16x128xf32> to vector<16x128xbf16>
    %cst_30 = arith.constant dense<0.000000e+00> : vector<16x32xf32>
    %47 = tpu.matmul %46, %12, %cst_30 {dimension_numbers = #tpu.dot_dimension_numbers<[1], [0], [0], [1], [0, 0, 1, 1], [], []>} : vector<16x128xbf16>, vector<128x32xbf16>, vector<16x32xf32> -> vector<16x32xf32>
    %48 = vector.broadcast %14 : vector<1x32xf32> to vector<16x32xf32>
    %49 = arith.addf %47, %48 : vector<16x32xf32>
    %cst_31 = arith.constant 1.000000e+00 : f32
    %50 = vector.broadcast %cst_31 : f32 to vector<16x32xf32>
    %51 = arith.addf %32, %50 : vector<16x32xf32>
    %52 = arith.mulf %49, %51 : vector<16x32xf32>
    %53 = arith.addf %52, %0 : vector<16x32xf32>
    %c1 = arith.constant 1 : index
    %c0_32 = arith.constant 0 : index
    %c0_33 = arith.constant 0 : index
    %54 = vector.load %arg3[%c1, %c0_32, %c0_33] : memref<2x32x32xbf16, #tpu.memory_space<vmem>>, vector<1x32x32xbf16>
    %55 = vector.shape_cast %54 : vector<1x32x32xbf16> to vector<32x32xbf16>
    %c1_34 = arith.constant 1 : index
    %c0_35 = arith.constant 0 : index
    %c0_36 = arith.constant 0 : index
    %56 = vector.load %arg4[%c1_34, %c0_35, %c0_36] : memref<2x32x32xbf16, #tpu.memory_space<vmem>>, vector<1x32x32xbf16>
    %57 = vector.shape_cast %56 : vector<1x32x32xbf16> to vector<32x32xbf16>
    %c1_37 = arith.constant 1 : index
    %c0_38 = arith.constant 0 : index
    %c0_39 = arith.constant 0 : index
    %58 = vector.load %arg5[%c1_37, %c0_38, %c0_39] : memref<2x32x128xbf16, #tpu.memory_space<vmem>>, vector<1x32x128xbf16>
    %59 = vector.shape_cast %58 : vector<1x32x128xbf16> to vector<32x128xbf16>
    %c1_40 = arith.constant 1 : index
    %c0_41 = arith.constant 0 : index
    %c0_42 = arith.constant 0 : index
    %60 = vector.load %arg6[%c1_40, %c0_41, %c0_42] : memref<2x1x128xf32, #tpu.memory_space<vmem>>, vector<1x1x128xf32>
    %61 = vector.shape_cast %60 : vector<1x1x128xf32> to vector<1x128xf32>
    %c1_43 = arith.constant 1 : index
    %c0_44 = arith.constant 0 : index
    %c0_45 = arith.constant 0 : index
    %62 = vector.load %arg7[%c1_43, %c0_44, %c0_45] : memref<2x128x32xbf16, #tpu.memory_space<vmem>>, vector<1x128x32xbf16>
    %63 = vector.shape_cast %62 : vector<1x128x32xbf16> to vector<128x32xbf16>
    %c1_46 = arith.constant 1 : index
    %c0_47 = arith.constant 0 : index
    %c0_48 = arith.constant 0 : index
    %64 = vector.load %arg8[%c1_46, %c0_47, %c0_48] : memref<2x1x32xf32, #tpu.memory_space<vmem>>, vector<1x1x32xf32>
    %65 = vector.shape_cast %64 : vector<1x1x32xf32> to vector<1x32xf32>
    %cst_49 = arith.constant dense<0.000000e+00> : vector<16xf32>
    %66 = vector.multi_reduction <add>, %53, %cst_49 [1] : vector<16x32xf32> to vector<16xf32>
    %67 = vector.shape_cast %66 : vector<16xf32> to vector<16x1xf32>
    %cst_50 = arith.constant 3.200000e+01 : f32
    %68 = vector.broadcast %cst_50 : f32 to vector<16x1xf32>
    %69 = arith.divf %67, %68 : vector<16x1xf32>
    %70 = vector.broadcast %69 : vector<16x1xf32> to vector<16x32xf32>
    %71 = arith.subf %53, %70 : vector<16x32xf32>
    %72 = arith.mulf %71, %71 : vector<16x32xf32>
    %cst_51 = arith.constant dense<0.000000e+00> : vector<16xf32>
    %73 = vector.multi_reduction <add>, %72, %cst_51 [1] : vector<16x32xf32> to vector<16xf32>
    %74 = vector.shape_cast %73 : vector<16xf32> to vector<16x1xf32>
    %cst_52 = arith.constant 3.200000e+01 : f32
    %75 = vector.broadcast %cst_52 : f32 to vector<16x1xf32>
    %76 = arith.divf %74, %75 : vector<16x1xf32>
    %cst_53 = arith.constant 9.99999974E-6 : f32
    %77 = vector.broadcast %cst_53 : f32 to vector<16x1xf32>
    %78 = arith.addf %76, %77 : vector<16x1xf32>
    %79 = math.rsqrt %78 : vector<16x1xf32>
    %80 = vector.broadcast %79 : vector<16x1xf32> to vector<16x32xf32>
    %81 = arith.mulf %71, %80 : vector<16x32xf32>
    %cst_54 = arith.constant dense<0.000000e+00> : vector<16x32xf32>
    %82 = tpu.matmul %2, %55, %cst_54 {dimension_numbers = #tpu.dot_dimension_numbers<[1], [0], [0], [1], [0, 0, 1, 1], [], []>} : vector<16x32xbf16>, vector<32x32xbf16>, vector<16x32xf32> -> vector<16x32xf32>
    %cst_55 = arith.constant dense<0.000000e+00> : vector<16x32xf32>
    %83 = tpu.matmul %2, %57, %cst_55 {dimension_numbers = #tpu.dot_dimension_numbers<[1], [0], [0], [1], [0, 0, 1, 1], [], []>} : vector<16x32xbf16>, vector<32x32xbf16>, vector<16x32xf32> -> vector<16x32xf32>
    %cst_56 = arith.constant 1.000000e+00 : f32
    %84 = vector.broadcast %cst_56 : f32 to vector<16x32xf32>
    %85 = arith.addf %82, %84 : vector<16x32xf32>
    %86 = arith.mulf %81, %85 : vector<16x32xf32>
    %87 = arith.truncf %86 : vector<16x32xf32> to vector<16x32xbf16>
    %cst_57 = arith.constant dense<0.000000e+00> : vector<16x128xf32>
    %88 = tpu.matmul %87, %59, %cst_57 {dimension_numbers = #tpu.dot_dimension_numbers<[1], [0], [0], [1], [0, 0, 1, 1], [], []>} : vector<16x32xbf16>, vector<32x128xbf16>, vector<16x128xf32> -> vector<16x128xf32>
    %89 = vector.broadcast %61 : vector<1x128xf32> to vector<16x128xf32>
    %90 = arith.addf %88, %89 : vector<16x128xf32>
    %91 = arith.negf %90 : vector<16x128xf32>
    %92 = math.exp %91 : vector<16x128xf32>
    %cst_58 = arith.constant 1.000000e+00 : f32
    %93 = vector.broadcast %cst_58 : f32 to vector<16x128xf32>
    %94 = arith.addf %93, %92 : vector<16x128xf32>
    %95 = arith.divf %93, %94 : vector<16x128xf32>
    %96 = arith.mulf %90, %95 : vector<16x128xf32>
    %97 = arith.truncf %96 : vector<16x128xf32> to vector<16x128xbf16>
    %cst_59 = arith.constant dense<0.000000e+00> : vector<16x32xf32>
    %98 = tpu.matmul %97, %63, %cst_59 {dimension_numbers = #tpu.dot_dimension_numbers<[1], [0], [0], [1], [0, 0, 1, 1], [], []>} : vector<16x128xbf16>, vector<128x32xbf16>, vector<16x32xf32> -> vector<16x32xf32>
    %99 = vector.broadcast %65 : vector<1x32xf32> to vector<16x32xf32>
    %100 = arith.addf %98, %99 : vector<16x32xf32>
    %cst_60 = arith.constant 1.000000e+00 : f32
    %101 = vector.broadcast %cst_60 : f32 to vector<16x32xf32>
    %102 = arith.addf %83, %101 : vector<16x32xf32>
    %103 = arith.mulf %100, %102 : vector<16x32xf32>
    %104 = arith.addf %103, %53 : vector<16x32xf32>
    %c0_61 = arith.constant 0 : index
    %c0_62 = arith.constant 0 : index
    %105 = vector.load %arg9[%c0_61, %c0_62] : memref<16x32xf32, #tpu.memory_space<vmem>>, vector<16x32xf32>
    tpu.vector_store %arg9[%c0_61, %c0_62], %104 {strides = array<i32>} : memref<16x32xf32, #tpu.memory_space<vmem>>, vector<16x32xf32>,
    return
  }
  func.func @transform_0(%arg0: i32) -> (i32, i32) {
    %c0_i32 = arith.constant 0 : i32
    %c0_i32_0 = arith.constant 0 : i32
    return %arg0, %c0_i32 : i32, i32
  }
  func.func @transform_1(%arg0: i32) -> (i32, i32) {
    %c0_i32 = arith.constant 0 : i32
    %c0_i32_0 = arith.constant 0 : i32
    return %arg0, %c0_i32 : i32, i32
  }
  func.func @transform_2(%arg0: i32) -> (i32, i32, i32) {
    %c0_i32 = arith.constant 0 : i32
    %c0_i32_0 = arith.constant 0 : i32
    %c0_i32_1 = arith.constant 0 : i32
    %c0_i32_2 = arith.constant 0 : i32
    return %c0_i32, %c0_i32_0, %c0_i32_1 : i32, i32, i32
  }
  func.func @transform_3(%arg0: i32) -> (i32, i32, i32) {
    %c0_i32 = arith.constant 0 : i32
    %c0_i32_0 = arith.constant 0 : i32
    %c0_i32_1 = arith.constant 0 : i32
    %c0_i32_2 = arith.constant 0 : i32
    return %c0_i32, %c0_i32_0, %c0_i32_1 : i32, i32, i32
  }
  func.func @transform_4(%arg0: i32) -> (i32, i32, i32) {
    %c0_i32 = arith.constant 0 : i32
    %c0_i32_0 = arith.constant 0 : i32
    %c0_i32_1 = arith.constant 0 : i32
    %c0_i32_2 = arith.constant 0 : i32
    return %c0_i32, %c0_i32_0, %c0_i32_1 : i32, i32, i32
  }
  func.func @transform_5(%arg0: i32) -> (i32, i32, i32) {
    %c0_i32 = arith.constant 0 : i32
    %c0_i32_0 = arith.constant 0 : i32
    %c0_i32_1 = arith.constant 0 : i32
    %c0_i32_2 = arith.constant 0 : i32
    return %c0_i32, %c0_i32_0, %c0_i32_1 : i32, i32, i32
  }
  func.func @transform_6(%arg0: i32) -> (i32, i32, i32) {
    %c0_i32 = arith.constant 0 : i32
    %c0_i32_0 = arith.constant 0 : i32
    %c0_i32_1 = arith.constant 0 : i32
    %c0_i32_2 = arith.constant 0 : i32
    return %c0_i32, %c0_i32_0, %c0_i32_1 : i32, i32, i32
  }
  func.func @transform_7(%arg0: i32) -> (i32, i32, i32) {
    %c0_i32 = arith.constant 0 : i32
    %c0_i32_0 = arith.constant 0 : i32
    %c0_i32_1 = arith.constant 0 : i32
    %c0_i32_2 = arith.constant 0 : i32
    return %c0_i32, %c0_i32_0, %c0_i32_1 : i32, i32, i32
  }
  func.func @transform_8(%arg0: i32) -> (i32, i32) {
    %c0_i32 = arith.constant 0 : i32
    %c0_i32_0 = arith.constant 0 : i32
    return %arg0, %c0_i32 : i32, i32
  }
}

</mosaic_0001>

<llo_original>
// kernel: tpu_custom_call.1
$region0: #{tpu_custom_call.1}
  #allocation0 [shape = 'u32[]', space=smem, size = 0x4, offset = 0x4, fixed_abs, tag = 'smem constant byte address 0x4 - core index']
  #allocation1 [shape = 'u32[144,128]{1,0:T(1,128)}', space=vmem, size = 0x12000, scoped, tag = 'internal scratch']
  %s0 = inlined_call_operand.hbm [shape: f32[16,32], index: 0, kind: input, shape index: {}]
  %s1 = inlined_call_operand.hbm [shape: f32[16,32], index: 1, kind: input, shape index: {}]
  %s2 = inlined_call_operand.hbm [shape: bf16[2,32,32], index: 2, kind: input, shape index: {}]
  %s3 = inlined_call_operand.hbm [shape: bf16[2,32,32], index: 3, kind: input, shape index: {}]
  %s4 = inlined_call_operand.hbm [shape: bf16[2,32,128], index: 4, kind: input, shape index: {}]
  %s5 = inlined_call_operand.hbm [shape: f32[2,1,128], index: 5, kind: input, shape index: {}]
  %s6 = inlined_call_operand.hbm [shape: bf16[2,128,32], index: 6, kind: input, shape index: {}]
  %s7 = inlined_call_operand.hbm [shape: f32[2,1,32], index: 7, kind: input, shape index: {}]
  %s8 = inlined_call_operand.hbm [shape: f32[16,32], index: 8, kind: output, shape index: {}]
  %s9 = sld [smem:[#allocation0]]
  $region74: #{tpu_custom_call.1} parent=0
    _
  %s11 = ssub.s32 1, %s9
  %s12 = scalar_select 0, %s11, %s9
  $region1: #{tpu_custom_call.1} parent=0
    #allocation2 [shape = 'u8[8192]{0}', space=vmem, size = 0x2000, scoped, tag = 'input window, operand 0, single buffered']
    #allocation3 [shape = 's32[1]{0}', space=sflag, size = 0x4, scoped, tag = 'scoped memory for tpu_custom_call.1']
    #allocation4 [shape = 's32[1]{0}', space=sflag, size = 0x4, scoped, tag = 'scoped memory for tpu_custom_call.1']
    #allocation5 [shape = 'u8[8192]{0}', space=vmem, size = 0x2000, scoped, tag = 'input window, operand 1, single buffered']
    #allocation6 [shape = 's32[1]{0}', space=sflag, size = 0x4, scoped, tag = 'scoped memory for tpu_custom_call.1']
    #allocation7 [shape = 'u8[16384]{0}', space=vmem, size = 0x4000, scoped, tag = 'input window, operand 2, single buffered']
    #allocation8 [shape = 'u8[16384]{0}', space=vmem, size = 0x4000, scoped, tag = 'input window, operand 3, single buffered']
    #allocation9 [shape = 's32[1]{0}', space=sflag, size = 0x4, scoped, tag = 'scoped memory for tpu_custom_call.1']
    #allocation10 [shape = 'u8[16384]{0}', space=vmem, size = 0x4000, scoped, tag = 'input window, operand 4, single buffered']
    #allocation11 [shape = 'u8[1024]{0}', space=vmem, size = 0x400, scoped, tag = 'input window, operand 5, single buffered']
    #allocation12 [shape = 's32[1]{0}', space=sflag, size = 0x4, scoped, tag = 'scoped memory for tpu_custom_call.1']
    #allocation13 [shape = 'u8[65536]{0}', space=vmem, size = 0x10000, scoped, tag = 'input window, operand 6, single buffered']
    #allocation14 [shape = 'u8[1024]{0}', space=vmem, size = 0x400, scoped, tag = 'input window, operand 7, single buffered']
    #allocation15 [shape = 's32[1]{0}', space=sflag, size = 0x4, scoped, tag = 'scoped memory for tpu_custom_call.1']
    #allocation16 [shape = 'u8[8192]{0}', space=vmem, size = 0x2000, scoped, tag = 'output window, operand 0, single buffered']
    %13 = vsyncpa [#allocation3], 0
    %14 = vsyncpa [#allocation6], 0
    %15 = vsyncpa [#allocation9], 0
    %16 = vsyncpa [#allocation12], 0
    %17 = vsyncpa [#allocation15], 0
    %18 = vsyncpa [#allocation4], 0
    // Predicated region
    $region2: #{tpu_custom_call.1} parent=1 // pred_check
      _
    $region3: #{tpu_custom_call.1} parent=1 // pred_check_branch
      %20 = sbr.rel (0) target = $region5
    $region4: #{tpu_custom_call.1} parent=1 // pred_region
      %s22 = ssub.s32 256, 256
      %23 = vsyncadd [#allocation3], %s22
      %s24 = sshll.u32 [#allocation2], 4
      %s25 = int_to_ptr.vmem [resolvable:$true] %s24
      %30 = dma.hbm_to_vmem [thread:$0]  %s0, 256, %s25, [#allocation3], 128, 128, 8
    $region5: #{tpu_custom_call.1} parent=1 // pred_fallthru
      _
    // Predicated region
    $region6: #{tpu_custom_call.1} parent=1 // pred_check
      _
    $region7: #{tpu_custom_call.1} parent=1 // pred_check_branch
      %32 = sbr.rel (0) target = $region9
    $region8: #{tpu_custom_call.1} parent=1 // pred_region
      %s34 = ssub.s32 256, 256
      %35 = vsyncadd [#allocation6], %s34
      %s36 = sshll.u32 [#allocation5], 4
      %s37 = int_to_ptr.vmem [resolvable:$true] %s36
      %42 = dma.hbm_to_vmem [thread:$0]  %s1, 256, %s37, [#allocation6], 128, 128, 8
    $region9: #{tpu_custom_call.1} parent=1 // pred_fallthru
      _
    // Predicated region
    $region10: #{tpu_custom_call.1} parent=1 // pred_check
      _
    $region11: #{tpu_custom_call.1} parent=1 // pred_check_branch
      %44 = sbr.rel (0) target = $region13
    $region12: #{tpu_custom_call.1} parent=1 // pred_region
      %s46 = ssub.s32 512, 512
      %47 = vsyncadd [#allocation6], %s46
      %s48 = sshll.u32 [#allocation7], 4
      %s49 = int_to_ptr.vmem [resolvable:$true] %s48
      %54 = dma.hbm_to_vmem [thread:$0]  %s2, 512, %s49, [#allocation6], 64, 64, 4
    $region13: #{tpu_custom_call.1} parent=1 // pred_fallthru
      _
    // Predicated region
    $region14: #{tpu_custom_call.1} parent=1 // pred_check
      _
    $region15: #{tpu_custom_call.1} parent=1 // pred_check_branch
      %56 = sbr.rel (0) target = $region17
    $region16: #{tpu_custom_call.1} parent=1 // pred_region
      %s58 = ssub.s32 512, 512
      %59 = vsyncadd [#allocation9], %s58
      %s60 = sshll.u32 [#allocation8], 4
      %s61 = int_to_ptr.vmem [resolvable:$true] %s60
      %66 = dma.hbm_to_vmem [thread:$0]  %s3, 512, %s61, [#allocation9], 64, 64, 4
    $region17: #{tpu_custom_call.1} parent=1 // pred_fallthru
      _
    // Predicated region
    $region18: #{tpu_custom_call.1} parent=1 // pred_check
      _
    $region19: #{tpu_custom_call.1} parent=1 // pred_check_branch
      %68 = sbr.rel (0) target = $region21
    $region20: #{tpu_custom_call.1} parent=1 // pred_region
      %s70 = ssub.s32 512, 512
      %71 = vsyncadd [#allocation9], %s70
      %s72 = sshll.u32 [#allocation10], 4
      %s73 = int_to_ptr.vmem [resolvable:$true] %s72
      %78 = dma.hbm_to_vmem [thread:$0]  %s4, 512, %s73, [#allocation9], 64, 64, 4
    $region21: #{tpu_custom_call.1} parent=1 // pred_fallthru
      _
    // Predicated region
    $region22: #{tpu_custom_call.1} parent=1 // pred_check
      _
    $region23: #{tpu_custom_call.1} parent=1 // pred_check_branch
      %80 = sbr.rel (0) target = $region25
    $region24: #{tpu_custom_call.1} parent=1 // pred_region
      %s82 = ssub.s32 32, 32
      %83 = vsyncadd [#allocation12], %s82
      %s84 = sshll.u32 [#allocation11], 4
      %s85 = int_to_ptr.vmem [resolvable:$true] %s84
      %90 = dma.hbm_to_vmem [thread:$0]  %s5, 32, %s85, [#allocation12], 16, 16, 1
    $region25: #{tpu_custom_call.1} parent=1 // pred_fallthru
      _
    // Predicated region
    $region26: #{tpu_custom_call.1} parent=1 // pred_check
      _
    $region27: #{tpu_custom_call.1} parent=1 // pred_check_branch
      %92 = sbr.rel (0) target = $region29
    $region28: #{tpu_custom_call.1} parent=1 // pred_region
      %s94 = ssub.s32 2048, 2048
      %95 = vsyncadd [#allocation12], %s94
      %s96 = sshll.u32 [#allocation13], 4
      %s97 = int_to_ptr.vmem [resolvable:$true] %s96
      %102 = dma.hbm_to_vmem [thread:$0]  %s6, 2048, %s97, [#allocation12], 64, 64, 4
    $region29: #{tpu_custom_call.1} parent=1 // pred_fallthru
      _
    // Predicated region
    $region30: #{tpu_custom_call.1} parent=1 // pred_check
      _
    $region31: #{tpu_custom_call.1} parent=1 // pred_check_branch
      %104 = sbr.rel (0) target = $region33
    $region32: #{tpu_custom_call.1} parent=1 // pred_region
      %s106 = ssub.s32 32, 32
      %107 = vsyncadd [#allocation15], %s106
      %s108 = sshll.u32 [#allocation14], 4
      %s109 = int_to_ptr.vmem [resolvable:$true] %s108
      %114 = dma.hbm_to_vmem [thread:$0]  %s7, 32, %s109, [#allocation15], 16, 16, 1
    $region33: #{tpu_custom_call.1} parent=1 // pred_fallthru
      _
    // Predicated region
    $region34: #{tpu_custom_call.1} parent=1 // pred_check
      _
    $region35: #{tpu_custom_call.1} parent=1 // pred_check_branch
      %116 = sbr.rel (0) target = $region37
    $region36: #{tpu_custom_call.1} parent=1 // pred_region
      %117 = dma.done [#allocation3], 256
    $region37: #{tpu_custom_call.1} parent=1 // pred_fallthru
      _
    // Predicated region
    $region38: #{tpu_custom_call.1} parent=1 // pred_check
      _
    $region39: #{tpu_custom_call.1} parent=1 // pred_check_branch
      %119 = sbr.rel (0) target = $region41
    $region40: #{tpu_custom_call.1} parent=1 // pred_region
      %120 = dma.done [#allocation6], 256
    $region41: #{tpu_custom_call.1} parent=1 // pred_fallthru
      _
    // Predicated region
    $region42: #{tpu_custom_call.1} parent=1 // pred_check
      _
    $region43: #{tpu_custom_call.1} parent=1 // pred_check_branch
      %122 = sbr.rel (0) target = $region45
    $region44: #{tpu_custom_call.1} parent=1 // pred_region
      %123 = dma.done [#allocation6], 512
    $region45: #{tpu_custom_call.1} parent=1 // pred_fallthru
      _
    // Predicated region
    $region46: #{tpu_custom_call.1} parent=1 // pred_check
      _
    $region47: #{tpu_custom_call.1} parent=1 // pred_check_branch
      %125 = sbr.rel (0) target = $region49
    $region48: #{tpu_custom_call.1} parent=1 // pred_region
      %126 = dma.done [#allocation9], 512
    $region49: #{tpu_custom_call.1} parent=1 // pred_fallthru
      _
    // Predicated region
    $region50: #{tpu_custom_call.1} parent=1 // pred_check
      _
    $region51: #{tpu_custom_call.1} parent=1 // pred_check_branch
      %128 = sbr.rel (0) target = $region53
    $region52: #{tpu_custom_call.1} parent=1 // pred_region
      %129 = dma.done [#allocation9], 512
    $region53: #{tpu_custom_call.1} parent=1 // pred_fallthru
      _
    // Predicated region
    $region54: #{tpu_custom_call.1} parent=1 // pred_check
      _
    $region55: #{tpu_custom_call.1} parent=1 // pred_check_branch
      %131 = sbr.rel (0) target = $region57
    $region56: #{tpu_custom_call.1} parent=1 // pred_region
      %132 = dma.done [#allocation12], 32
    $region57: #{tpu_custom_call.1} parent=1 // pred_fallthru
      _
    // Predicated region
    $region58: #{tpu_custom_call.1} parent=1 // pred_check
      _
    $region59: #{tpu_custom_call.1} parent=1 // pred_check_branch
      %134 = sbr.rel (0) target = $region61
    $region60: #{tpu_custom_call.1} parent=1 // pred_region
      %135 = dma.done [#allocation12], 2048
    $region61: #{tpu_custom_call.1} parent=1 // pred_fallthru
      _
    // Predicated region
    $region62: #{tpu_custom_call.1} parent=1 // pred_check
      _
    $region63: #{tpu_custom_call.1} parent=1 // pred_check_branch
      %137 = sbr.rel (0) target = $region65
    $region64: #{tpu_custom_call.1} parent=1 // pred_region
      %138 = dma.done [#allocation15], 32
    $region65: #{tpu_custom_call.1} parent=1 // pred_fallthru
      _
    %v140 = vld [vmem:[#allocation2] sm:$0xff]
    %v141 = vld [vmem:[#allocation2 + $0x8] sm:$0xff]
    %v142 = vld [vmem:[#allocation5] sm:$0xff]
    %v143 = vld [vmem:[#allocation5 + $0x8] sm:$0xff]
    %v144 = vpack.c.bf16 %v143, %v142
    %v145 = vld [vmem:[#allocation7] sm:$0xf]
    %v146 = vld [vmem:[#allocation7 + $0x4] sm:$0xf]
    %v147 = vld [vmem:[#allocation7 + $0x8] sm:$0xf]
    %v148 = vld [vmem:[#allocation7 + $0xc] sm:$0xf]
    %v149 = vld [vmem:[#allocation8] sm:$0xf]
    %v150 = vld [vmem:[#allocation8 + $0x4] sm:$0xf]
    %v151 = vld [vmem:[#allocation8 + $0x8] sm:$0xf]
    %v152 = vld [vmem:[#allocation8 + $0xc] sm:$0xf]
    %v153 = vld [vmem:[#allocation10] sm:$0xf]
    %v154 = vld [vmem:[#allocation10 + $0x4] sm:$0xf]
    %v155 = vld [vmem:[#allocation10 + $0x8] sm:$0xf]
    %v156 = vld [vmem:[#allocation10 + $0xc] sm:$0xf]
    %v157 = vld [vmem:[#allocation11] sm:$0x1]
    %v158 = vld [vmem:[#allocation13] sm:$0xf]
    %v159 = vld [vmem:[#allocation13 + $0x4] sm:$0xf]
    %v160 = vld [vmem:[#allocation13 + $0x8] sm:$0xf]
    %v161 = vld [vmem:[#allocation13 + $0xc] sm:$0xf]
    %v162 = vld [vmem:[#allocation13 + $0x10] sm:$0xf]
    %v163 = vld [vmem:[#allocation13 + $0x14] sm:$0xf]
    %v164 = vld [vmem:[#allocation13 + $0x18] sm:$0xf]
    %v165 = vld [vmem:[#allocation13 + $0x1c] sm:$0xf]
    %v166 = vld [vmem:[#allocation13 + $0x20] sm:$0xf]
    %v167 = vld [vmem:[#allocation13 + $0x24] sm:$0xf]
    %v168 = vld [vmem:[#allocation13 + $0x28] sm:$0xf]
    %v169 = vld [vmem:[#allocation13 + $0x2c] sm:$0xf]
    %v170 = vld [vmem:[#allocation13 + $0x30] sm:$0xf]
    %v171 = vld [vmem:[#allocation13 + $0x34] sm:$0xf]
    %v172 = vld [vmem:[#allocation13 + $0x38] sm:$0xf]
    %v173 = vld [vmem:[#allocation13 + $0x3c] sm:$0xf]
    %v174 = vld [vmem:[#allocation14] sm:$0x1]
    %vm175 = vcmask 261120
    %v176 = vsel %vm175, %v140, 0.0
    %177 = vadd.xlane.f32.xlu0 %v176
    %v178 = vpop.xlane.xlu0 %177
    %v179 = vsel %vm175, %v141, 0.0
    %180 = vadd.xlane.f32.xlu0 %v179
    %v181 = vpop.xlane.xlu0 %180
    %v182 = vrcp.pop 32.0
    %v183 = vmul.f32 %v178, %v182
    %v184 = vmul.f32 %v181, %v182
    %v185 = vsub.f32 %v140, %v183
    %v186 = vsub.f32 %v141, %v184
    %v187 = vmul.f32 %v185, %v185
    %v188 = vmul.f32 %v186, %v186
    %v189 = vsel %vm175, %v187, 0.0
    %190 = vadd.xlane.f32.xlu0 %v189
    %v191 = vpop.xlane.xlu0 %190
    %v192 = vsel %vm175, %v188, 0.0
    %193 = vadd.xlane.f32.xlu0 %v192
    %v194 = vpop.xlane.xlu0 %193
    %v195 = vmul.f32 %v191, %v182
    %v196 = vmul.f32 %v194, %v182
    %v197 = vadd.f32 %v195, 1e-05
    %v198 = vadd.f32 %v196, 1e-05
    %v199 = vrsqrt.pop %v197
    %v200 = vrsqrt.pop %v198
    %v201 = vmul.f32 %v185, %v199
    %v202 = vmul.f32 %v186, %v200
    %v207 = vunpack.c.l.b16 %v145
    %v208 = vunpack.c.l.b16 %v146
    %v209 = vunpack.c.l.b16 %v147
    %v210 = vunpack.c.l.b16 %v148
    %v211 = vpack.c.b16 %v208, %v207
    %v212 = vpack.c.b16 %v210, %v209
    %v216 = vsel %vm175, %v144, 0
    %218 = vmatprep.subr.bf16.mxu0 0
    %219 = vmatpush1.bf16.msra.mxu0 %v211
    %220 = vmatprep.subr.bf16.mxu0 0
    %221 = vmatpush1.bf16.msra.mxu0 %v212
    %222 = vmatprep.subr.bf16.mxu0 0
    %223 = vmatpush1.bf16.msra.mxu0 0
    %224 = vmatprep.subr.bf16.mxu0 0
    %225 = vmatpush1.bf16.msra.mxu0 0
    %226 = vmatprep.subr.bf16.mxu0 0
    %227 = vmatpush1.bf16.msra.mxu0 0
    %228 = vmatprep.subr.bf16.mxu0 0
    %229 = vmatpush1.bf16.msra.mxu0 0
    %230 = vmatprep.subr.bf16.mxu0 0
    %231 = vmatpush1.bf16.msra.mxu0 0
    %232 = vmatprep.subr.bf16.mxu0 0
    %233 = vmatpush1.bf16.msra.mxu0 0
    %234 = vmatprep.subr.bf16.mxu0 0
    %235 = vmatpush1.bf16.msra.mxu0 0
    %236 = vmatprep.subr.bf16.mxu0 0
    %237 = vmatpush1.bf16.msra.mxu0 0
    %238 = vmatprep.subr.bf16.mxu0 0
    %239 = vmatpush1.bf16.msra.mxu0 0
    %240 = vmatprep.subr.bf16.mxu0 0
    %241 = vmatpush1.bf16.msra.mxu0 0
    %242 = vmatprep.subr.bf16.mxu0 0
    %243 = vmatpush1.bf16.msra.mxu0 0
    %244 = vmatprep.subr.bf16.mxu0 0
    %245 = vmatpush1.bf16.msra.mxu0 0
    %246 = vmatprep.subr.bf16.mxu0 0
    %247 = vmatpush1.bf16.msra.mxu0 0
    %248 = vmatprep.subr.bf16.mxu0 0
    %249 = vmatpush1.bf16.msra.mxu0 0
    %250 = vmatprep.mubr.bf16.mxu0 0
    %251 = vmatmul.mubr.bf16.gmra.mrb[0].mxu0 %v216
    %v252 = vpop.f32.mrb[0].mxu0
    %v253 = vadd.f32 1.0, %v252
    %v254 = vpop.f32.mrb[0].mxu0
    %v255 = vpop.f32.mrb[0].mxu0
    %v256 = vadd.f32 1.0, %v255
    %v257 = vpop.f32.mrb[0].mxu0
    %258 = vdwg.mxu0
    %v259 = vmul.f32 %v201, %v253
    %v260 = vmul.f32 %v202, %v256
    %v261 = vpack.c.bf16 %v260, %v259
    %v263 = vlaneseq
    %v264 = vshrl.u32 %v263, 7
    %v265 = vsub.s32 0, %v264
    %v266 = vrot.slane %v157, %v265
    %v272 = vunpack.c.l.b16 %v153
    %v273 = vunpack.c.l.b16 %v154
    %v274 = vunpack.c.l.b16 %v155
    %v275 = vunpack.c.l.b16 %v156
    %v276 = vpack.c.b16 %v273, %v272
    %v277 = vpack.c.b16 %v275, %v274
    %v281 = vsel %vm175, %v261, 0
    %283 = vmatprep.subr.bf16.mxu0 0
    %284 = vmatpush1.bf16.msra.mxu0 %v276
    %285 = vmatprep.subr.bf16.mxu0 0
    %286 = vmatpush1.bf16.msra.mxu0 %v277
    %287 = vmatprep.subr.bf16.mxu0 0
    %288 = vmatpush1.bf16.msra.mxu0 0
    %289 = vmatprep.subr.bf16.mxu0 0
    %290 = vmatpush1.bf16.msra.mxu0 0
    %291 = vmatprep.subr.bf16.mxu0 0
    %292 = vmatpush1.bf16.msra.mxu0 0
    %293 = vmatprep.subr.bf16.mxu0 0
    %294 = vmatpush1.bf16.msra.mxu0 0
    %295 = vmatprep.subr.bf16.mxu0 0
    %296 = vmatpush1.bf16.msra.mxu0 0
    %297 = vmatprep.subr.bf16.mxu0 0
    %298 = vmatpush1.bf16.msra.mxu0 0
    %299 = vmatprep.subr.bf16.mxu0 0
    %300 = vmatpush1.bf16.msra.mxu0 0
    %301 = vmatprep.subr.bf16.mxu0 0
    %302 = vmatpush1.bf16.msra.mxu0 0
    %303 = vmatprep.subr.bf16.mxu0 0
    %304 = vmatpush1.bf16.msra.mxu0 0
    %305 = vmatprep.subr.bf16.mxu0 0
    %306 = vmatpush1.bf16.msra.mxu0 0
    %307 = vmatprep.subr.bf16.mxu0 0
    %308 = vmatpush1.bf16.msra.mxu0 0
    %309 = vmatprep.subr.bf16.mxu0 0
    %310 = vmatpush1.bf16.msra.mxu0 0
    %311 = vmatprep.subr.bf16.mxu0 0
    %312 = vmatpush1.bf16.msra.mxu0 0
    %313 = vmatprep.subr.bf16.mxu0 0
    %314 = vmatpush1.bf16.msra.mxu0 0
    %315 = vmatprep.mubr.bf16.mxu0 0
    %316 = vmatmul.mubr.bf16.gmra.mrb[0].mxu0 %v281
    %v317 = vpop.f32.mrb[0].mxu0
    %v318 = vadd.f32 %v266, %v317
    %v319 = vpop.f32.mrb[0].mxu0
    %v320 = vpop.f32.mrb[0].mxu0
    %v321 = vadd.f32 %v266, %v320
    %v322 = vpop.f32.mrb[0].mxu0
    %323 = vdwg.mxu0
    %v324 = vxor.u32 %v318, 2147483648
    %v325 = vxor.u32 %v321, 2147483648
    %v326 = vmul.f32 %v324, 1.442695
    %v327 = vpow.pop %v326
    %v328 = vmul.f32 %v325, 1.442695
    %v329 = vpow.pop %v328
    %v330 = vadd.f32 %v327, 1.0
    %v331 = vadd.f32 %v329, 1.0
    %v332 = vrcp.pop %v330
    %v333 = vmul.f32 1.0, %v332
    %v334 = vrcp.pop %v331
    %v335 = vmul.f32 1.0, %v334
    %v336 = vmul.f32 %v318, %v333
    %v337 = vmul.f32 %v321, %v335
    %v338 = vpack.c.bf16 %v337, %v336
    %v340 = vlaneseq
    %v341 = vshrl.u32 %v340, 7
    %v342 = vsub.s32 0, %v341
    %v343 = vrot.slane %v174, %v342
    %v361 = vunpack.c.l.b16 %v158
    %v362 = vunpack.c.l.b16 %v159
    %v363 = vunpack.c.l.b16 %v160
    %v364 = vunpack.c.l.b16 %v161
    %v365 = vunpack.c.l.b16 %v162
    %v366 = vunpack.c.l.b16 %v163
    %v367 = vunpack.c.l.b16 %v164
    %v368 = vunpack.c.l.b16 %v165
    %v369 = vunpack.c.l.b16 %v166
    %v370 = vunpack.c.l.b16 %v167
    %v371 = vunpack.c.l.b16 %v168
    %v372 = vunpack.c.l.b16 %v169
    %v373 = vunpack.c.l.b16 %v170
    %v374 = vunpack.c.l.b16 %v171
    %v375 = vunpack.c.l.b16 %v172
    %v376 = vunpack.c.l.b16 %v173
    %v377 = vpack.c.b16 %v362, %v361
    %v378 = vpack.c.b16 %v364, %v363
    %v379 = vpack.c.b16 %v366, %v365
    %v380 = vpack.c.b16 %v368, %v367
    %v381 = vpack.c.b16 %v370, %v369
    %v382 = vpack.c.b16 %v372, %v371
    %v383 = vpack.c.b16 %v374, %v373
    %v384 = vpack.c.b16 %v376, %v375
    %393 = vmatprep.subr.bf16.mxu0 0
    %394 = vmatpush1.bf16.msra.mxu0 %v377
    %395 = vmatprep.subr.bf16.mxu0 0
    %396 = vmatpush1.bf16.msra.mxu0 %v378
    %397 = vmatprep.subr.bf16.mxu0 0
    %398 = vmatpush1.bf16.msra.mxu0 %v379
    %399 = vmatprep.subr.bf16.mxu0 0
    %400 = vmatpush1.bf16.msra.mxu0 %v380
    %401 = vmatprep.subr.bf16.mxu0 0
    %402 = vmatpush1.bf16.msra.mxu0 %v381
    %403 = vmatprep.subr.bf16.mxu0 0
    %404 = vmatpush1.bf16.msra.mxu0 %v382
    %405 = vmatprep.subr.bf16.mxu0 0
    %406 = vmatpush1.bf16.msra.mxu0 %v383
    %407 = vmatprep.subr.bf16.mxu0 0
    %408 = vmatpush1.bf16.msra.mxu0 %v384
    %409 = vmatprep.subr.bf16.mxu0 0
    %410 = vmatpush1.bf16.msra.mxu0 0
    %411 = vmatprep.subr.bf16.mxu0 0
    %412 = vmatpush1.bf16.msra.mxu0 0
    %413 = vmatprep.subr.bf16.mxu0 0
    %414 = vmatpush1.bf16.msra.mxu0 0
    %415 = vmatprep.subr.bf16.mxu0 0
    %416 = vmatpush1.bf16.msra.mxu0 0
    %417 = vmatprep.subr.bf16.mxu0 0
    %418 = vmatpush1.bf16.msra.mxu0 0
    %419 = vmatprep.subr.bf16.mxu0 0
    %420 = vmatpush1.bf16.msra.mxu0 0
    %421 = vmatprep.subr.bf16.mxu0 0
    %422 = vmatpush1.bf16.msra.mxu0 0
    %423 = vmatprep.subr.bf16.mxu0 0
    %424 = vmatpush1.bf16.msra.mxu0 0
    %425 = vmatprep.mubr.bf16.mxu0 0
    %426 = vmatmul.mubr.bf16.gmra.mrb[0].mxu0 %v338
    %v427 = vpop.f32.mrb[0].mxu0
    %v428 = vadd.f32 %v343, %v427
    %v429 = vpop.f32.mrb[0].mxu0
    %v430 = vpop.f32.mrb[0].mxu0
    %v431 = vadd.f32 %v343, %v430
    %v432 = vpop.f32.mrb[0].mxu0
    %433 = vdwg.mxu0
    %v438 = vunpack.c.l.b16 %v149
    %v439 = vunpack.c.l.b16 %v150
    %v440 = vunpack.c.l.b16 %v151
    %v441 = vunpack.c.l.b16 %v152
    %v442 = vpack.c.b16 %v439, %v438
    %v443 = vpack.c.b16 %v441, %v440
    %446 = vmatprep.subr.bf16.mxu0 0
    %447 = vmatpush1.bf16.msra.mxu0 %v442
    %448 = vmatprep.subr.bf16.mxu0 0
    %449 = vmatpush1.bf16.msra.mxu0 %v443
    %450 = vmatprep.subr.bf16.mxu0 0
    %451 = vmatpush1.bf16.msra.mxu0 0
    %452 = vmatprep.subr.bf16.mxu0 0
    %453 = vmatpush1.bf16.msra.mxu0 0
    %454 = vmatprep.subr.bf16.mxu0 0
    %455 = vmatpush1.bf16.msra.mxu0 0
    %456 = vmatprep.subr.bf16.mxu0 0
    %457 = vmatpush1.bf16.msra.mxu0 0
    %458 = vmatprep.subr.bf16.mxu0 0
    %459 = vmatpush1.bf16.msra.mxu0 0
    %460 = vmatprep.subr.bf16.mxu0 0
    %461 = vmatpush1.bf16.msra.mxu0 0
    %462 = vmatprep.subr.bf16.mxu0 0
    %463 = vmatpush1.bf16.msra.mxu0 0
    %464 = vmatprep.subr.bf16.mxu0 0
    %465 = vmatpush1.bf16.msra.mxu0 0
    %466 = vmatprep.subr.bf16.mxu0 0
    %467 = vmatpush1.bf16.msra.mxu0 0
    %468 = vmatprep.subr.bf16.mxu0 0
    %469 = vmatpush1.bf16.msra.mxu0 0
    %470 = vmatprep.subr.bf16.mxu0 0
    %471 = vmatpush1.bf16.msra.mxu0 0
    %472 = vmatprep.subr.bf16.mxu0 0
    %473 = vmatpush1.bf16.msra.mxu0 0
    %474 = vmatprep.subr.bf16.mxu0 0
    %475 = vmatpush1.bf16.msra.mxu0 0
    %476 = vmatprep.subr.bf16.mxu0 0
    %477 = vmatpush1.bf16.msra.mxu0 0
    %478 = vmatprep.mubr.bf16.mxu0 0
    %479 = vmatmul.mubr.bf16.gmra.mrb[0].mxu0 %v216
    %v480 = vpop.f32.mrb[0].mxu0
    %v481 = vadd.f32 1.0, %v480
    %v482 = vpop.f32.mrb[0].mxu0
    %v483 = vpop.f32.mrb[0].mxu0
    %v484 = vadd.f32 1.0, %v483
    %v485 = vpop.f32.mrb[0].mxu0
    %486 = vdwg.mxu0
    %v487 = vmul.f32 %v428, %v481
    %v488 = vmul.f32 %v431, %v484
    %v489 = vadd.f32 %v487, %v140
    %v490 = vadd.f32 %v488, %v141
    %s491 = scalar_lea.vmem [#allocation7], 16
    %v492 = vld [vmem:[%s491] sm:$0xf]
    %v493 = vld [vmem:[%s491 + $0x4] sm:$0xf]
    %v494 = vld [vmem:[%s491 + $0x8] sm:$0xf]
    %v495 = vld [vmem:[%s491 + $0xc] sm:$0xf]
    %s496 = scalar_lea.vmem [#allocation8], 16
    %v497 = vld [vmem:[%s496] sm:$0xf]
    %v498 = vld [vmem:[%s496 + $0x4] sm:$0xf]
    %v499 = vld [vmem:[%s496 + $0x8] sm:$0xf]
    %v500 = vld [vmem:[%s496 + $0xc] sm:$0xf]
    %s501 = scalar_lea.vmem [#allocation10], 16
    %v502 = vld [vmem:[%s501] sm:$0xf]
    %v503 = vld [vmem:[%s501 + $0x4] sm:$0xf]
    %v504 = vld [vmem:[%s501 + $0x8] sm:$0xf]
    %v505 = vld [vmem:[%s501 + $0xc] sm:$0xf]
    %s506 = scalar_lea.vmem [#allocation11], 1
    %v507 = vld [vmem:[%s506] sm:$0x1]
    %s508 = scalar_lea.vmem [#allocation13], 64
    %v509 = vld [vmem:[%s508] sm:$0xf]
    %v510 = vld [vmem:[%s508 + $0x4] sm:$0xf]
    %v511 = vld [vmem:[%s508 + $0x8] sm:$0xf]
    %v512 = vld [vmem:[%s508 + $0xc] sm:$0xf]
    %v513 = vld [vmem:[%s508 + $0x10] sm:$0xf]
    %v514 = vld [vmem:[%s508 + $0x14] sm:$0xf]
    %v515 = vld [vmem:[%s508 + $0x18] sm:$0xf]
    %v516 = vld [vmem:[%s508 + $0x1c] sm:$0xf]
    %v517 = vld [vmem:[%s508 + $0x20] sm:$0xf]
    %v518 = vld [vmem:[%s508 + $0x24] sm:$0xf]
    %v519 = vld [vmem:[%s508 + $0x28] sm:$0xf]
    %v520 = vld [vmem:[%s508 + $0x2c] sm:$0xf]
    %v521 = vld [vmem:[%s508 + $0x30] sm:$0xf]
    %v522 = vld [vmem:[%s508 + $0x34] sm:$0xf]
    %v523 = vld [vmem:[%s508 + $0x38] sm:$0xf]
    %v524 = vld [vmem:[%s508 + $0x3c] sm:$0xf]
    %s525 = scalar_lea.vmem [#allocation14], 1
    %v526 = vld [vmem:[%s525] sm:$0x1]
    %v527 = vsel %vm175, %v489, 0.0
    %528 = vadd.xlane.f32.xlu0 %v527
    %v529 = vpop.xlane.xlu0 %528
    %v530 = vsel %vm175, %v490, 0.0
    %531 = vadd.xlane.f32.xlu0 %v530
    %v532 = vpop.xlane.xlu0 %531
    %v533 = vmul.f32 %v529, %v182
    %v534 = vmul.f32 %v532, %v182
    %v535 = vsub.f32 %v489, %v533
    %v536 = vsub.f32 %v490, %v534
    %v537 = vmul.f32 %v535, %v535
    %v538 = vmul.f32 %v536, %v536
    %v539 = vsel %vm175, %v537, 0.0
    %540 = vadd.xlane.f32.xlu0 %v539
    %v541 = vpop.xlane.xlu0 %540
    %v542 = vsel %vm175, %v538, 0.0
    %543 = vadd.xlane.f32.xlu0 %v542
    %v544 = vpop.xlane.xlu0 %543
    %v545 = vmul.f32 %v541, %v182
    %v546 = vmul.f32 %v544, %v182
    %v547 = vadd.f32 %v545, 1e-05
    %v548 = vadd.f32 %v546, 1e-05
    %v549 = vrsqrt.pop %v547
    %v550 = vrsqrt.pop %v548
    %v551 = vmul.f32 %v535, %v549
    %v552 = vmul.f32 %v536, %v550
    %v557 = vunpack.c.l.b16 %v492
    %v558 = vunpack.c.l.b16 %v493
    %v559 = vunpack.c.l.b16 %v494
    %v560 = vunpack.c.l.b16 %v495
    %v561 = vpack.c.b16 %v558, %v557
    %v562 = vpack.c.b16 %v560, %v559
    %565 = vmatprep.subr.bf16.mxu0 0
    %566 = vmatpush1.bf16.msra.mxu0 %v561
    %567 = vmatprep.subr.bf16.mxu0 0
    %568 = vmatpush1.bf16.msra.mxu0 %v562
    %569 = vmatprep.subr.bf16.mxu0 0
    %570 = vmatpush1.bf16.msra.mxu0 0
    %571 = vmatprep.subr.bf16.mxu0 0
    %572 = vmatpush1.bf16.msra.mxu0 0
    %573 = vmatprep.subr.bf16.mxu0 0
    %574 = vmatpush1.bf16.msra.mxu0 0
    %575 = vmatprep.subr.bf16.mxu0 0
    %576 = vmatpush1.bf16.msra.mxu0 0
    %577 = vmatprep.subr.bf16.mxu0 0
    %578 = vmatpush1.bf16.msra.mxu0 0
    %579 = vmatprep.subr.bf16.mxu0 0
    %580 = vmatpush1.bf16.msra.mxu0 0
    %581 = vmatprep.subr.bf16.mxu0 0
    %582 = vmatpush1.bf16.msra.mxu0 0
    %583 = vmatprep.subr.bf16.mxu0 0
    %584 = vmatpush1.bf16.msra.mxu0 0
    %585 = vmatprep.subr.bf16.mxu0 0
    %586 = vmatpush1.bf16.msra.mxu0 0
    %587 = vmatprep.subr.bf16.mxu0 0
    %588 = vmatpush1.bf16.msra.mxu0 0
    %589 = vmatprep.subr.bf16.mxu0 0
    %590 = vmatpush1.bf16.msra.mxu0 0
    %591 = vmatprep.subr.bf16.mxu0 0
    %592 = vmatpush1.bf16.msra.mxu0 0
    %593 = vmatprep.subr.bf16.mxu0 0
    %594 = vmatpush1.bf16.msra.mxu0 0
    %595 = vmatprep.subr.bf16.mxu0 0
    %596 = vmatpush1.bf16.msra.mxu0 0
    %597 = vmatprep.mubr.bf16.mxu0 0
    %598 = vmatmul.mubr.bf16.gmra.mrb[0].mxu0 %v216
    %v599 = vpop.f32.mrb[0].mxu0
    %v600 = vadd.f32 1.0, %v599
    %v601 = vpop.f32.mrb[0].mxu0
    %v602 = vpop.f32.mrb[0].mxu0
    %v603 = vadd.f32 1.0, %v602
    %v604 = vpop.f32.mrb[0].mxu0
    %605 = vdwg.mxu0
    %v606 = vmul.f32 %v551, %v600
    %v607 = vmul.f32 %v552, %v603
    %v608 = vpack.c.bf16 %v607, %v606
    %v610 = vlaneseq
    %v611 = vshrl.u32 %v610, 7
    %v612 = vsub.s32 0, %v611
    %v613 = vrot.slane %v507, %v612
    %v619 = vunpack.c.l.b16 %v502
    %v620 = vunpack.c.l.b16 %v503
    %v621 = vunpack.c.l.b16 %v504
    %v622 = vunpack.c.l.b16 %v505
    %v623 = vpack.c.b16 %v620, %v619
    %v624 = vpack.c.b16 %v622, %v621
    %v628 = vsel %vm175, %v608, 0
    %630 = vmatprep.subr.bf16.mxu0 0
    %631 = vmatpush1.bf16.msra.mxu0 %v623
    %632 = vmatprep.subr.bf16.mxu0 0
    %633 = vmatpush1.bf16.msra.mxu0 %v624
    %634 = vmatprep.subr.bf16.mxu0 0
    %635 = vmatpush1.bf16.msra.mxu0 0
    %636 = vmatprep.subr.bf16.mxu0 0
    %637 = vmatpush1.bf16.msra.mxu0 0
    %638 = vmatprep.subr.bf16.mxu0 0
    %639 = vmatpush1.bf16.msra.mxu0 0
    %640 = vmatprep.subr.bf16.mxu0 0
    %641 = vmatpush1.bf16.msra.mxu0 0
    %642 = vmatprep.subr.bf16.mxu0 0
    %643 = vmatpush1.bf16.msra.mxu0 0
    %644 = vmatprep.subr.bf16.mxu0 0
    %645 = vmatpush1.bf16.msra.mxu0 0
    %646 = vmatprep.subr.bf16.mxu0 0
    %647 = vmatpush1.bf16.msra.mxu0 0
    %648 = vmatprep.subr.bf16.mxu0 0
    %649 = vmatpush1.bf16.msra.mxu0 0
    %650 = vmatprep.subr.bf16.mxu0 0
    %651 = vmatpush1.bf16.msra.mxu0 0
    %652 = vmatprep.subr.bf16.mxu0 0
    %653 = vmatpush1.bf16.msra.mxu0 0
    %654 = vmatprep.subr.bf16.mxu0 0
    %655 = vmatpush1.bf16.msra.mxu0 0
    %656 = vmatprep.subr.bf16.mxu0 0
    %657 = vmatpush1.bf16.msra.mxu0 0
    %658 = vmatprep.subr.bf16.mxu0 0
    %659 = vmatpush1.bf16.msra.mxu0 0
    %660 = vmatprep.subr.bf16.mxu0 0
    %661 = vmatpush1.bf16.msra.mxu0 0
    %662 = vmatprep.mubr.bf16.mxu0 0
    %663 = vmatmul.mubr.bf16.gmra.mrb[0].mxu0 %v628
    %v664 = vpop.f32.mrb[0].mxu0
    %v665 = vadd.f32 %v613, %v664
    %v666 = vpop.f32.mrb[0].mxu0
    %v667 = vpop.f32.mrb[0].mxu0
    %v668 = vadd.f32 %v613, %v667
    %v669 = vpop.f32.mrb[0].mxu0
    %670 = vdwg.mxu0
    %v671 = vxor.u32 %v665, 2147483648
    %v672 = vxor.u32 %v668, 2147483648
    %v673 = vmul.f32 %v671, 1.442695
    %v674 = vpow.pop %v673
    %v675 = vmul.f32 %v672, 1.442695
    %v676 = vpow.pop %v675
    %v677 = vadd.f32 %v674, 1.0
    %v678 = vadd.f32 %v676, 1.0
    %v679 = vrcp.pop %v677
    %v680 = vmul.f32 1.0, %v679
    %v681 = vrcp.pop %v678
    %v682 = vmul.f32 1.0, %v681
    %v683 = vmul.f32 %v665, %v680
    %v684 = vmul.f32 %v668, %v682
    %v685 = vpack.c.bf16 %v684, %v683
    %v687 = vlaneseq
    %v688 = vshrl.u32 %v687, 7
    %v689 = vsub.s32 0, %v688
    %v690 = vrot.slane %v526, %v689
    %v708 = vunpack.c.l.b16 %v509
    %v709 = vunpack.c.l.b16 %v510
    %v710 = vunpack.c.l.b16 %v511
    %v711 = vunpack.c.l.b16 %v512
    %v712 = vunpack.c.l.b16 %v513
    %v713 = vunpack.c.l.b16 %v514
    %v714 = vunpack.c.l.b16 %v515
    %v715 = vunpack.c.l.b16 %v516
    %v716 = vunpack.c.l.b16 %v517
    %v717 = vunpack.c.l.b16 %v518
    %v718 = vunpack.c.l.b16 %v519
    %v719 = vunpack.c.l.b16 %v520
    %v720 = vunpack.c.l.b16 %v521
    %v721 = vunpack.c.l.b16 %v522
    %v722 = vunpack.c.l.b16 %v523
    %v723 = vunpack.c.l.b16 %v524
    %v724 = vpack.c.b16 %v709, %v708
    %v725 = vpack.c.b16 %v711, %v710
    %v726 = vpack.c.b16 %v713, %v712
    %v727 = vpack.c.b16 %v715, %v714
    %v728 = vpack.c.b16 %v717, %v716
    %v729 = vpack.c.b16 %v719, %v718
    %v730 = vpack.c.b16 %v721, %v720
    %v731 = vpack.c.b16 %v723, %v722
    %740 = vmatprep.subr.bf16.mxu0 0
    %741 = vmatpush1.bf16.msra.mxu0 %v724
    %742 = vmatprep.subr.bf16.mxu0 0
    %743 = vmatpush1.bf16.msra.mxu0 %v725
    %744 = vmatprep.subr.bf16.mxu0 0
    %745 = vmatpush1.bf16.msra.mxu0 %v726
    %746 = vmatprep.subr.bf16.mxu0 0
    %747 = vmatpush1.bf16.msra.mxu0 %v727
    %748 = vmatprep.subr.bf16.mxu0 0
    %749 = vmatpush1.bf16.msra.mxu0 %v728
    %750 = vmatprep.subr.bf16.mxu0 0
    %751 = vmatpush1.bf16.msra.mxu0 %v729
    %752 = vmatprep.subr.bf16.mxu0 0
    %753 = vmatpush1.bf16.msra.mxu0 %v730
    %754 = vmatprep.subr.bf16.mxu0 0
    %755 = vmatpush1.bf16.msra.mxu0 %v731
    %756 = vmatprep.subr.bf16.mxu0 0
    %757 = vmatpush1.bf16.msra.mxu0 0
    %758 = vmatprep.subr.bf16.mxu0 0
    %759 = vmatpush1.bf16.msra.mxu0 0
    %760 = vmatprep.subr.bf16.mxu0 0
    %761 = vmatpush1.bf16.msra.mxu0 0
    %762 = vmatprep.subr.bf16.mxu0 0
    %763 = vmatpush1.bf16.msra.mxu0 0
    %764 = vmatprep.subr.bf16.mxu0 0
    %765 = vmatpush1.bf16.msra.mxu0 0
    %766 = vmatprep.subr.bf16.mxu0 0
    %767 = vmatpush1.bf16.msra.mxu0 0
    %768 = vmatprep.subr.bf16.mxu0 0
    %769 = vmatpush1.bf16.msra.mxu0 0
    %770 = vmatprep.subr.bf16.mxu0 0
    %771 = vmatpush1.bf16.msra.mxu0 0
    %772 = vmatprep.mubr.bf16.mxu0 0
    %773 = vmatmul.mubr.bf16.gmra.mrb[0].mxu0 %v685
    %v774 = vpop.f32.mrb[0].mxu0
    %v775 = vadd.f32 %v690, %v774
    %v776 = vpop.f32.mrb[0].mxu0
    %v777 = vpop.f32.mrb[0].mxu0
    %v778 = vadd.f32 %v690, %v777
    %v779 = vpop.f32.mrb[0].mxu0
    %780 = vdwg.mxu0
    %v785 = vunpack.c.l.b16 %v497
    %v786 = vunpack.c.l.b16 %v498
    %v787 = vunpack.c.l.b16 %v499
    %v788 = vunpack.c.l.b16 %v500
    %v789 = vpack.c.b16 %v786, %v785
    %v790 = vpack.c.b16 %v788, %v787
    %793 = vmatprep.subr.bf16.mxu0 0
    %794 = vmatpush1.bf16.msra.mxu0 %v789
    %795 = vmatprep.subr.bf16.mxu0 0
    %796 = vmatpush1.bf16.msra.mxu0 %v790
    %797 = vmatprep.subr.bf16.mxu0 0
    %798 = vmatpush1.bf16.msra.mxu0 0
    %799 = vmatprep.subr.bf16.mxu0 0
    %800 = vmatpush1.bf16.msra.mxu0 0
    %801 = vmatprep.subr.bf16.mxu0 0
    %802 = vmatpush1.bf16.msra.mxu0 0
    %803 = vmatprep.subr.bf16.mxu0 0
    %804 = vmatpush1.bf16.msra.mxu0 0
    %805 = vmatprep.subr.bf16.mxu0 0
    %806 = vmatpush1.bf16.msra.mxu0 0
    %807 = vmatprep.subr.bf16.mxu0 0
    %808 = vmatpush1.bf16.msra.mxu0 0
    %809 = vmatprep.subr.bf16.mxu0 0
    %810 = vmatpush1.bf16.msra.mxu0 0
    %811 = vmatprep.subr.bf16.mxu0 0
    %812 = vmatpush1.bf16.msra.mxu0 0
    %813 = vmatprep.subr.bf16.mxu0 0
    %814 = vmatpush1.bf16.msra.mxu0 0
    %815 = vmatprep.subr.bf16.mxu0 0
    %816 = vmatpush1.bf16.msra.mxu0 0
    %817 = vmatprep.subr.bf16.mxu0 0
    %818 = vmatpush1.bf16.msra.mxu0 0
    %819 = vmatprep.subr.bf16.mxu0 0
    %820 = vmatpush1.bf16.msra.mxu0 0
    %821 = vmatprep.subr.bf16.mxu0 0
    %822 = vmatpush1.bf16.msra.mxu0 0
    %823 = vmatprep.subr.bf16.mxu0 0
    %824 = vmatpush1.bf16.msra.mxu0 0
    %825 = vmatprep.mubr.bf16.mxu0 0
    %826 = vmatmul.mubr.bf16.gmra.mrb[0].mxu0 %v216
    %v827 = vpop.f32.mrb[0].mxu0
    %v828 = vadd.f32 1.0, %v827
    %v829 = vpop.f32.mrb[0].mxu0
    %v830 = vpop.f32.mrb[0].mxu0
    %v831 = vadd.f32 1.0, %v830
    %v832 = vpop.f32.mrb[0].mxu0
    %833 = vdwg.mxu0
    %v834 = vmul.f32 %v775, %v828
    %v835 = vmul.f32 %v778, %v831
    %v836 = vadd.f32 %v834, %v489
    %v837 = vadd.f32 %v835, %v490
    %838 = vst.msk [vmem:[#allocation16] sm:$0xff] %vm175, %v836
    %839 = vst.msk [vmem:[#allocation16 + $0x8] sm:$0xff] %vm175, %v837
    // Predicated region
    $region66: #{tpu_custom_call.1} parent=1 // pred_check
      _
    $region67: #{tpu_custom_call.1} parent=1 // pred_check_branch
      %841 = sbr.rel (0) target = $region69
    $region68: #{tpu_custom_call.1} parent=1 // pred_region
      %s843 = ssub.s32 256, 256
      %844 = vsyncadd [#allocation4], %s843
      %s845 = sshll.u32 [#allocation16], 4
      %s846 = int_to_ptr.vmem [resolvable:$true] %s845
      %851 = dma.vmem_to_hbm [thread:$0]  %s846, 256, %s8, [#allocation4], 128, 128, 8
    $region69: #{tpu_custom_call.1} parent=1 // pred_fallthru
      _
    // Predicated region
    $region70: #{tpu_custom_call.1} parent=1 // pred_check
      _
    $region71: #{tpu_custom_call.1} parent=1 // pred_check_branch
      %853 = sbr.rel (0) target = $region73
    $region72: #{tpu_custom_call.1} parent=1 // pred_region
      %854 = dma.done [#allocation4], 256
    $region73: #{tpu_custom_call.1} parent=1 // pred_fallthru
      _
    %855 = vsyncpa [#allocation3], 1
    %856 = vsyncpa [#allocation6], 1
    %857 = vsyncpa [#allocation9], 1
    %858 = vsyncpa [#allocation12], 1
    %859 = vsyncpa [#allocation15], 1
    %860 = vsyncpa [#allocation4], 1

</llo_original>
